<compile_context>
chip_gen: v7x
topology: tpu7x:2x2x1
jax: 0.10.0
libtpu: 0.0.40
codegen_flags: <defaults>
</compile_context>

<pallas_src>
import jax
import jax.numpy as jnp
from jax.experimental import pallas as pl
from jax.experimental.pallas import tpu as pltpu


LANE = 128           # lane width: batch-tile sizes are multiples of this
TARGET_TILE = 1024   # target lanes per grid step (overhead amortization)
CHUNK = 512          # inner sub-chunk: bounds vreg live ranges of h1/h2


def _round_up(x, m):
    return -(-x // m) * m


def _pick_tiling(batch):
    """Choose (block_b, n_tiles) for a given batch size."""
    b_min = _round_up(batch, LANE)
    if b_min <= LANE:
        return b_min, 1                      # tiny batch: one tile
    # Even number of ~TARGET_TILE tiles so v7x megacore sharding engages.
    n = max(2, -(-b_min // TARGET_TILE))
    if n % 2:
        n += 1
    block = _round_up(-(-b_min // n), LANE)
    n = -(-b_min // block)
    return block, n


def _make_kernel(block_b, chunk):
    n_chunks = block_b // chunk

    def kernel(xt_ref, w1_ref, w2_ref, b1_ref, b2_ref, w3_ref, b3_ref, o_ref):
        w1 = w1_ref[...]          # [20, 3]   (VMEM-resident)
        w2 = w2_ref[...]          # [20, 20]
        b1 = b1_ref[...]          # [20, 1]   broadcasts along lanes in '+'
        b2 = b2_ref[...]          # [20, 1]
        w3 = w3_ref[...]          # [1, 20]
        b3 = b3_ref[...]          # [1, 1]

        def layers(x):            # x: [3, chunk], batch on lanes
            h1 = jnp.tanh(
                jnp.dot(w1, x, preferred_element_type=jnp.float32) + b1)
            h2 = jnp.tanh(
                jnp.dot(w2, h1, preferred_element_type=jnp.float32) + b2)
            # Layer 3 on the (otherwise idle) MXU; [1, chunk] stays lane-dense.
            return jnp.dot(w3, h2, preferred_element_type=jnp.float32) + b3

        if n_chunks == 1:
            o_ref[...] = layers(xt_ref[...]).astype(o_ref.dtype)
        else:
            def body(c, carry):
                off = pl.multiple_of(c * chunk, chunk)
                x = xt_ref[:, pl.ds(off, chunk)]
                o_ref[:, pl.ds(off, chunk)] = layers(x).astype(o_ref.dtype)
                return carry
            jax.lax.fori_loop(0, n_chunks, body, None, unroll=True)

    return kernel


def bignet_forward(x, params, *, block_b=None):
    """x: [B, 3] f32; params in PyTorch layout (w: [out, in], b: [out])."""
    B = x.shape[0]
    if block_b is None:
        block_b, n_tiles = _pick_tiling(B)
    else:
        block_b = _round_up(block_b, LANE)
        n_tiles = -(-B // block_b)
    B_pad = n_tiles * block_b
    chunk = CHUNK if block_b % CHUNK == 0 else block_b

    # Layout plumbing only.  If the producer can already emit x as [3, B],
    # pass that instead: at large B this transpose (not the kernel) dominates
    # end-to-end HBM traffic.
    xt = x.T                                                   # [3, B]
    if B_pad != B:
        xt = jnp.pad(xt, ((0, 0), (0, B_pad - B)))             # [3, B_pad]

    w1 = params["w1"]                                          # [20, 3]
    w2 = params["w2"]                                          # [20, 20]
    b1 = params["b1"].reshape(20, 1)
    b2 = params["b2"].reshape(20, 1)
    w3 = params["w3"].reshape(1, 20)
    b3 = params["b3"].reshape(1, 1)

    resident = lambda shp: pl.BlockSpec(shp, lambda i: (0,) * len(shp))

    out_t = pl.pallas_call(
        _make_kernel(block_b, chunk),
        out_shape=jax.ShapeDtypeStruct((1, B_pad), jnp.float32),
        grid=(n_tiles,),
        in_specs=[
            pl.BlockSpec((3, block_b), lambda i: (0, i)),      # x tile streams
            resident(w1.shape),
            resident(w2.shape),
            resident(b1.shape),
            resident(b2.shape),
            resident(w3.shape),
            resident(b3.shape),
        ],
        out_specs=pl.BlockSpec((1, block_b), lambda i: (0, i)),
        compiler_params=pltpu.CompilerParams(
            dimension_semantics=("parallel",),   # megacore sharding on v7x
            vmem_limit_bytes=32 * 1024 * 1024,   # headroom over v5e's 16 MiB default
        ),
    )(xt, w1, w2, b1, b2, w3, b3)                # [1, B_pad]

    return out_t[:, :B].T                        # back to [B, 1]


def init_params(key):
    """PyTorch nn.Linear default init: U[-1/sqrt(fan_in), +1/sqrt(fan_in)]."""
    def linear(key, fan_in, fan_out):
        kw, kb = jax.random.split(key)
        bound = 1.0 / (fan_in ** 0.5)
        w = jax.random.uniform(kw, (fan_out, fan_in), jnp.float32, -bound, bound)
        b = jax.random.uniform(kb, (fan_out,), jnp.float32, -bound, bound)
        return w, b

    k1, k2, k3 = jax.random.split(key, 3)
    w1, b1 = linear(k1, 3, 20)
    w2, b2 = linear(k2, 20, 20)
    w3, b3 = linear(k3, 20, 1)
    return {"w1": w1, "b1": b1, "w2": w2, "b2": b2, "w3": w3, "b3": b3}


def _reference(x, p):
    h = jnp.tanh(x @ p["w1"].T + p["b1"])
    h = jnp.tanh(h @ p["w2"].T + p["b2"])
    return h @ p["w3"].T + p["b3"]


if __name__ == "__main__":
    key = jax.random.PRNGKey(0)
    kx, kp, kx2 = jax.random.split(key, 3)
    params = init_params(kp)

    # Small-shape primary check (single tile path).
    batch = 8
    x = jax.random.normal(kx, (batch, 3), jnp.float32)
    out = bignet_forward(x, params)
    jax.block_until_ready(out)
    ref = _reference(x, params)
    assert out.shape == (batch, 1)
    assert jnp.allclose(out, ref, atol=1e-4, rtol=1e-4), "mismatch vs reference (small)"

    # Multi-tile + inner chunk-loop path (2 grid tiles x 2 inner chunks).
    batch2 = 2048
    x2 = jax.random.normal(kx2, (batch2, 3), jnp.float32)
    out2 = bignet_forward(x2, params)
    jax.block_until_ready(out2)
    ref2 = _reference(x2, params)
    assert out2.shape == (batch2, 1)
    assert jnp.allclose(out2, ref2, atol=1e-4, rtol=1e-4), "mismatch vs reference (large)"

    print("KERNEL_OK")
</pallas_src>

<mosaic_0001>
module attributes {stable_mosaic.version = 11 : i64} {
  func.func @kernel(%arg0: i32, %arg1: memref<3x128xf32, #tpu.memory_space<vmem>>, %arg2: memref<20x3xf32, #tpu.memory_space<vmem>>, %arg3: memref<20x20xf32, #tpu.memory_space<vmem>>, %arg4: memref<20x1xf32, #tpu.memory_space<vmem>>, %arg5: memref<20x1xf32, #tpu.memory_space<vmem>>, %arg6: memref<1x20xf32, #tpu.memory_space<vmem>>, %arg7: memref<1x1xf32, #tpu.memory_space<vmem>>, %arg8: memref<1x128xf32, #tpu.memory_space<vmem>>) attributes {dimension_semantics = [#tpu.dimension_semantics<parallel>], iteration_bounds = array<i64: 1>, scalar_prefetch = 0 : i64, scratch_operands = 0 : i64, tpu.core_type = #tpu.core_type<tc>, window_params = [{transform_indices = @transform_0, window_bounds = array<i64: 3, 128>}, {pipeline_mode = #tpu.pipeline_mode<synchronous>, transform_indices = @transform_1, window_bounds = array<i64: 20, 3>}, {pipeline_mode = #tpu.pipeline_mode<synchronous>, transform_indices = @transform_2, window_bounds = array<i64: 20, 20>}, {pipeline_mode = #tpu.pipeline_mode<synchronous>, transform_indices = @transform_3, window_bounds = array<i64: 20, 1>}, {pipeline_mode = #tpu.pipeline_mode<synchronous>, transform_indices = @transform_4, window_bounds = array<i64: 20, 1>}, {pipeline_mode = #tpu.pipeline_mode<synchronous>, transform_indices = @transform_5, window_bounds = array<i64: 1, 20>}, {pipeline_mode = #tpu.pipeline_mode<synchronous>, transform_indices = @transform_6, window_bounds = array<i64: 1, 1>}, {transform_indices = @transform_7, window_bounds = array<i64: 1, 128>}]} {
    %c0 = arith.constant 0 : index
    %c0_0 = arith.constant 0 : index
    %0 = vector.load %arg2[%c0, %c0_0] : memref<20x3xf32, #tpu.memory_space<vmem>>, vector<20x3xf32>
    %c0_1 = arith.constant 0 : index
    %c0_2 = arith.constant 0 : index
    %1 = vector.load %arg3[%c0_1, %c0_2] : memref<20x20xf32, #tpu.memory_space<vmem>>, vector<20x20xf32>
    %c0_3 = arith.constant 0 : index
    %c0_4 = arith.constant 0 : index
    %2 = vector.load %arg4[%c0_3, %c0_4] : memref<20x1xf32, #tpu.memory_space<vmem>>, vector<20x1xf32>
    %c0_5 = arith.constant 0 : index
    %c0_6 = arith.constant 0 : index
    %3 = vector.load %arg5[%c0_5, %c0_6] : memref<20x1xf32, #tpu.memory_space<vmem>>, vector<20x1xf32>
    %c0_7 = arith.constant 0 : index
    %c0_8 = arith.constant 0 : index
    %4 = vector.load %arg6[%c0_7, %c0_8] : memref<1x20xf32, #tpu.memory_space<vmem>>, vector<1x20xf32>
    %c0_9 = arith.constant 0 : index
    %c0_10 = arith.constant 0 : index
    %5 = vector.load %arg7[%c0_9, %c0_10] : memref<1x1xf32, #tpu.memory_space<vmem>>, vector<1x1xf32>
    %c0_11 = arith.constant 0 : index
    %c0_12 = arith.constant 0 : index
    %6 = vector.load %arg1[%c0_11, %c0_12] : memref<3x128xf32, #tpu.memory_space<vmem>>, vector<3x128xf32>
    %cst = arith.constant dense<0.000000e+00> : vector<20x128xf32>
    %7 = tpu.matmul %0, %6, %cst {dimension_numbers = #tpu.dot_dimension_numbers<[1], [0], [0], [1], [0, 0, 1, 1], [], []>} : vector<20x3xf32>, vector<3x128xf32>, vector<20x128xf32> -> vector<20x128xf32>
    %8 = vector.broadcast %2 : vector<20x1xf32> to vector<20x128xf32>
    %9 = arith.addf %7, %8 : vector<20x128xf32>
    %10 = math.tanh %9 : vector<20x128xf32>
    %cst_13 = arith.constant dense<0.000000e+00> : vector<20x128xf32>
    %11 = tpu.matmul %1, %10, %cst_13 {dimension_numbers = #tpu.dot_dimension_numbers<[1], [0], [0], [1], [0, 0, 1, 1], [], []>} : vector<20x20xf32>, vector<20x128xf32>, vector<20x128xf32> -> vector<20x128xf32>
    %12 = vector.broadcast %3 : vector<20x1xf32> to vector<20x128xf32>
    %13 = arith.addf %11, %12 : vector<20x128xf32>
    %14 = math.tanh %13 : vector<20x128xf32>
    %cst_14 = arith.constant dense<0.000000e+00> : vector<1x128xf32>
    %15 = tpu.matmul %4, %14, %cst_14 {dimension_numbers = #tpu.dot_dimension_numbers<[1], [0], [0], [1], [0, 0, 1, 1], [], []>} : vector<1x20xf32>, vector<20x128xf32>, vector<1x128xf32> -> vector<1x128xf32>
    %16 = vector.broadcast %5 : vector<1x1xf32> to vector<1x128xf32>
    %17 = arith.addf %15, %16 : vector<1x128xf32>
    %c0_15 = arith.constant 0 : index
    %c0_16 = arith.constant 0 : index
    %18 = vector.load %arg8[%c0_15, %c0_16] : memref<1x128xf32, #tpu.memory_space<vmem>>, vector<1x128xf32>
    tpu.vector_store %arg8[%c0_15, %c0_16], %17 {strides = array<i32>} : memref<1x128xf32, #tpu.memory_space<vmem>>, vector<1x128xf32>,
    return
  }
  func.func @transform_0(%arg0: i32) -> (i32, i32) {
    %c0_i32 = arith.constant 0 : i32
    %c0_i32_0 = arith.constant 0 : i32
    return %c0_i32, %arg0 : i32, i32
  }
  func.func @transform_1(%arg0: i32) -> (i32, i32) {
    %c0_i32 = arith.constant 0 : i32
    %c0_i32_0 = arith.constant 0 : i32
    %c0_i32_1 = arith.constant 0 : i32
    return %c0_i32, %c0_i32_0 : i32, i32
  }
  func.func @transform_2(%arg0: i32) -> (i32, i32) {
    %c0_i32 = arith.constant 0 : i32
    %c0_i32_0 = arith.constant 0 : i32
    %c0_i32_1 = arith.constant 0 : i32
    return %c0_i32, %c0_i32_0 : i32, i32
  }
  func.func @transform_3(%arg0: i32) -> (i32, i32) {
    %c0_i32 = arith.constant 0 : i32
    %c0_i32_0 = arith.constant 0 : i32
    %c0_i32_1 = arith.constant 0 : i32
    return %c0_i32, %c0_i32_0 : i32, i32
  }
  func.func @transform_4(%arg0: i32) -> (i32, i32) {
    %c0_i32 = arith.constant 0 : i32
    %c0_i32_0 = arith.constant 0 : i32
    %c0_i32_1 = arith.constant 0 : i32
    return %c0_i32, %c0_i32_0 : i32, i32
  }
  func.func @transform_5(%arg0: i32) -> (i32, i32) {
    %c0_i32 = arith.constant 0 : i32
    %c0_i32_0 = arith.constant 0 : i32
    %c0_i32_1 = arith.constant 0 : i32
    return %c0_i32, %c0_i32_0 : i32, i32
  }
  func.func @transform_6(%arg0: i32) -> (i32, i32) {
    %c0_i32 = arith.constant 0 : i32
    %c0_i32_0 = arith.constant 0 : i32
    %c0_i32_1 = arith.constant 0 : i32
    return %c0_i32, %c0_i32_0 : i32, i32
  }
  func.func @transform_7(%arg0: i32) -> (i32, i32) {
    %c0_i32 = arith.constant 0 : i32
    %c0_i32_0 = arith.constant 0 : i32
    return %c0_i32, %arg0 : i32, i32
  }
}

</mosaic_0001>

<llo_original>
// kernel: tpu_custom_call.1
$region0: #{tpu_custom_call.1}
  #allocation0 [shape = 'u32[]', space=smem, size = 0x4, offset = 0x4, fixed_abs, tag = 'smem constant byte address 0x4 - core index']
  #allocation1 [shape = 'u32[144,128]{1,0:T(1,128)}', space=vmem, size = 0x12000, scoped, tag = 'internal scratch']
  #allocation2 [shape = 'f32[1,1]{1,0:T(1,128)S(1)}', space=vmem, size = 0x200, scoped, tag = 'scoped memory for tpu_custom_call.1']
  %s0 = inlined_call_operand.vmem [shape: f32[3,128], index: 0, kind: input, shape index: {}]
  %s1 = inlined_call_operand.vmem [shape: f32[20,3], index: 1, kind: input, shape index: {}]
  %s2 = inlined_call_operand.vmem [shape: f32[20,20], index: 2, kind: input, shape index: {}]
  %s3 = inlined_call_operand.vmem [shape: f32[20,1], index: 3, kind: input, shape index: {}]
  %s4 = inlined_call_operand.vmem [shape: f32[20,1], index: 4, kind: input, shape index: {}]
  %s5 = inlined_call_operand.vmem [shape: f32[1,20], index: 5, kind: input, shape index: {}]
  %s6 = inlined_call_operand.<no memory space> [shape: f32[1,1], index: 6, kind: input, shape index: {}]
  %s7 = inlined_call_operand.hbm [shape: f32[1,128], index: 7, kind: output, shape index: {}]
  %s8 = sld [smem:[#allocation0]]
  $region38: #{tpu_custom_call.1} parent=0
    _
  %s10 = ssub.s32 1, %s8
  %s11 = scalar_select 0, %s10, %s8
  %v12 = vstv %s6
  %13 = vst [vmem:[#allocation2] sm:$0x1] %v12
  $region1: #{tpu_custom_call.1} parent=0
    #allocation3 [shape = 'u8[512]{0}', space=vmem, size = 0x400, scoped, tag = 'output window, operand 0, single buffered']
    #allocation4 [shape = 's32[1]{0}', space=sflag, size = 0x4, scoped, tag = 'scoped memory for tpu_custom_call.1']
    %14 = vsyncpa [#allocation4], 0
    // Predicated region
    $region2: #{tpu_custom_call.1} parent=1 // pred_check
      _
    $region3: #{tpu_custom_call.1} parent=1 // pred_check_branch
      %16 = sbr.rel (0) target = $region5
    $region4: #{tpu_custom_call.1} parent=1 // pred_region
      _
    $region5: #{tpu_custom_call.1} parent=1 // pred_fallthru
      _
    // Predicated region
    $region6: #{tpu_custom_call.1} parent=1 // pred_check
      _
    $region7: #{tpu_custom_call.1} parent=1 // pred_check_branch
      %18 = sbr.rel (0) target = $region9
    $region8: #{tpu_custom_call.1} parent=1 // pred_region
      _
    $region9: #{tpu_custom_call.1} parent=1 // pred_fallthru
      _
    // Predicated region
    $region10: #{tpu_custom_call.1} parent=1 // pred_check
      _
    $region11: #{tpu_custom_call.1} parent=1 // pred_check_branch
      %20 = sbr.rel (0) target = $region13
    $region12: #{tpu_custom_call.1} parent=1 // pred_region
      _
    $region13: #{tpu_custom_call.1} parent=1 // pred_fallthru
      _
    // Predicated region
    $region14: #{tpu_custom_call.1} parent=1 // pred_check
      _
    $region15: #{tpu_custom_call.1} parent=1 // pred_check_branch
      %22 = sbr.rel (0) target = $region17
    $region16: #{tpu_custom_call.1} parent=1 // pred_region
      _
    $region17: #{tpu_custom_call.1} parent=1 // pred_fallthru
      _
    // Predicated region
    $region18: #{tpu_custom_call.1} parent=1 // pred_check
      _
    $region19: #{tpu_custom_call.1} parent=1 // pred_check_branch
      %24 = sbr.rel (0) target = $region21
    $region20: #{tpu_custom_call.1} parent=1 // pred_region
      _
    $region21: #{tpu_custom_call.1} parent=1 // pred_fallthru
      _
    // Predicated region
    $region22: #{tpu_custom_call.1} parent=1 // pred_check
      _
    $region23: #{tpu_custom_call.1} parent=1 // pred_check_branch
      %26 = sbr.rel (0) target = $region25
    $region24: #{tpu_custom_call.1} parent=1 // pred_region
      _
    $region25: #{tpu_custom_call.1} parent=1 // pred_fallthru
      _
    // Predicated region
    $region26: #{tpu_custom_call.1} parent=1 // pred_check
      _
    $region27: #{tpu_custom_call.1} parent=1 // pred_check_branch
      %28 = sbr.rel (0) target = $region29
    $region28: #{tpu_custom_call.1} parent=1 // pred_region
      _
    $region29: #{tpu_custom_call.1} parent=1 // pred_fallthru
      _
    %v29 = vld [vmem:[%s1] sm:$0xff]
    %v30 = vld [vmem:[%s1 + $0x8] sm:$0xff]
    %v31 = vld [vmem:[%s1 + $0x10] sm:$0xf]
    %v32 = vld [vmem:[%s2] sm:$0xff]
    %v33 = vld [vmem:[%s2 + $0x8] sm:$0xff]
    %v34 = vld [vmem:[%s2 + $0x10] sm:$0xf]
    %v35 = vld [vmem:[%s3] sm:$0xff]
    %v36 = vld [vmem:[%s3 + $0x8] sm:$0xff]
    %v37 = vld [vmem:[%s3 + $0x10] sm:$0xf]
    %v38 = vld [vmem:[%s4] sm:$0xff]
    %v39 = vld [vmem:[%s4 + $0x8] sm:$0xff]
    %v40 = vld [vmem:[%s4 + $0x10] sm:$0xf]
    %v41 = vld [vmem:[%s5] sm:$0x1]
    %v42 = vld [vmem:[#allocation2] sm:$0x1]
    %v43 = vld [vmem:[%s0] sm:$0x7]
    %45 = vset.pattern.permute.xlu0 0
    %46 = vperm.xlu0 %45, %v35
    %v47 = vpop.permute.xlu0 %46
    %50 = vset.pattern.permute.xlu0 0
    %51 = vperm.xlu0 %50, %v36
    %v52 = vpop.permute.xlu0 %51
    %55 = vset.pattern.permute.xlu0 0
    %56 = vperm.xlu0 %55, %v37
    %v57 = vpop.permute.xlu0 %56
    %vm59 = vcmask 23552
    %v61 = vsel %vm59, %v29, 0
    %v64 = vsel %vm59, %v30, 0
    %v67 = vsel %vm59, %v31, 0
    %vm69 = vcmask 1042432
    %v71 = vsel %vm69, %v43, 0
    %73 = vmatprep.subr.mxu0 0.0
    %74 = vmatpush1.msra.mxu0 %v71
    %75 = vmatprep.subr.mxu0 0.0
    %76 = vmatpush1.msra.mxu0 0.0
    %77 = vmatprep.subr.mxu0 0.0
    %78 = vmatpush1.msra.mxu0 0.0
    %79 = vmatprep.subr.mxu0 0.0
    %80 = vmatpush1.msra.mxu0 0.0
    %81 = vmatprep.subr.mxu0 0.0
    %82 = vmatpush1.msra.mxu0 0.0
    %83 = vmatprep.subr.mxu0 0.0
    %84 = vmatpush1.msra.mxu0 0.0
    %85 = vmatprep.subr.mxu0 0.0
    %86 = vmatpush1.msra.mxu0 0.0
    %87 = vmatprep.subr.mxu0 0.0
    %88 = vmatpush1.msra.mxu0 0.0
    %89 = vmatprep.subr.mxu0 0.0
    %90 = vmatpush1.msra.mxu0 0.0
    %91 = vmatprep.subr.mxu0 0.0
    %92 = vmatpush1.msra.mxu0 0.0
    %93 = vmatprep.subr.mxu0 0.0
    %94 = vmatpush1.msra.mxu0 0.0
    %95 = vmatprep.subr.mxu0 0.0
    %96 = vmatpush1.msra.mxu0 0.0
    %97 = vmatprep.subr.mxu0 0.0
    %98 = vmatpush1.msra.mxu0 0.0
    %99 = vmatprep.subr.mxu0 0.0
    %100 = vmatpush1.msra.mxu0 0.0
    %101 = vmatprep.subr.mxu0 0.0
    %102 = vmatpush1.msra.mxu0 0.0
    %103 = vmatprep.subr.mxu0 0.0
    %104 = vmatpush1.msra.mxu0 0.0
    %105 = vmatprep.subr.mxu0 0.0
    %106 = vmatpush1.msra.mxu0 0.0
    %107 = vmatprep.subr.mxu0 0.0
    %108 = vmatpush1.msra.mxu0 0.0
    %109 = vmatprep.subr.mxu0 0.0
    %110 = vmatpush1.msra.mxu0 0.0
    %111 = vmatprep.subr.mxu0 0.0
    %112 = vmatpush1.msra.mxu0 0.0
    %113 = vmatprep.subr.mxu0 0.0
    %114 = vmatpush1.msra.mxu0 0.0
    %115 = vmatprep.subr.mxu0 0.0
    %116 = vmatpush1.msra.mxu0 0.0
    %117 = vmatprep.subr.mxu0 0.0
    %118 = vmatpush1.msra.mxu0 0.0
    %119 = vmatprep.subr.mxu0 0.0
    %120 = vmatpush1.msra.mxu0 0.0
    %121 = vmatprep.subr.mxu0 0.0
    %122 = vmatpush1.msra.mxu0 0.0
    %123 = vmatprep.subr.mxu0 0.0
    %124 = vmatpush1.msra.mxu0 0.0
    %125 = vmatprep.subr.mxu0 0.0
    %126 = vmatpush1.msra.mxu0 0.0
    %127 = vmatprep.subr.mxu0 0.0
    %128 = vmatpush1.msra.mxu0 0.0
    %129 = vmatprep.subr.mxu0 0.0
    %130 = vmatpush1.msra.mxu0 0.0
    %131 = vmatprep.subr.mxu0 0.0
    %132 = vmatpush1.msra.mxu0 0.0
    %133 = vmatprep.subr.mxu0 0.0
    %134 = vmatpush1.msra.mxu0 0.0
    %135 = vmatprep.subr.mxu0 0.0
    %136 = vmatpush1.msra.mxu0 0.0
    %137 = vmatprep.mubr.f32.mxu0 0.0
    %138 = vmatmul.mubr.f32.gmra.mrb[0].mxu0 %v61
    %v139 = vpop.f32.mrb[0].mxu0
    %v140 = vadd.f32 %v47, %v139
    %v141 = vpop.f32.mrb[0].mxu0
    %142 = vmatprep.mubr.f32.mxu0 0.0
    %143 = vmatmul.mubr.f32.gmra.mrb[0].mxu0 %v64
    %v144 = vpop.f32.mrb[0].mxu0
    %v145 = vadd.f32 %v52, %v144
    %v146 = vpop.f32.mrb[0].mxu0
    %147 = vmatprep.mubr.f32.mxu0 0.0
    %148 = vmatmul.mubr.f32.gmra.mrb[0].mxu0 %v67
    %v149 = vpop.f32.mrb[0].mxu0
    %v150 = vadd.f32 %v57, %v149
    %v151 = vpop.f32.mrb[0].mxu0
    %152 = vdwg.mxu0
    %v153 = vtanh.pop %v140
    %v154 = vtanh.pop %v145
    %v155 = vtanh.pop %v150
    %157 = vset.pattern.permute.xlu0 0
    %158 = vperm.xlu0 %157, %v38
    %v159 = vpop.permute.xlu0 %158
    %162 = vset.pattern.permute.xlu0 0
    %163 = vperm.xlu0 %162, %v39
    %v164 = vpop.permute.xlu0 %163
    %167 = vset.pattern.permute.xlu0 0
    %168 = vperm.xlu0 %167, %v40
    %v169 = vpop.permute.xlu0 %168
    %vm171 = vcmask 162816
    %v173 = vsel %vm171, %v32, 0
    %v176 = vsel %vm171, %v33, 0
    %v179 = vsel %vm171, %v34, 0
    %vm181 = vcmask 1043456
    %v183 = vsel %vm181, %v155, 0
    %185 = vmatprep.subr.mxu0 0.0
    %186 = vmatpush1.msra.mxu0 %v153
    %187 = vmatprep.subr.mxu0 0.0
    %188 = vmatpush1.msra.mxu0 %v154
    %189 = vmatprep.subr.mxu0 0.0
    %190 = vmatpush1.msra.mxu0 %v183
    %191 = vmatprep.subr.mxu0 0.0
    %192 = vmatpush1.msra.mxu0 0.0
    %193 = vmatprep.subr.mxu0 0.0
    %194 = vmatpush1.msra.mxu0 0.0
    %195 = vmatprep.subr.mxu0 0.0
    %196 = vmatpush1.msra.mxu0 0.0
    %197 = vmatprep.subr.mxu0 0.0
    %198 = vmatpush1.msra.mxu0 0.0
    %199 = vmatprep.subr.mxu0 0.0
    %200 = vmatpush1.msra.mxu0 0.0
    %201 = vmatprep.subr.mxu0 0.0
    %202 = vmatpush1.msra.mxu0 0.0
    %203 = vmatprep.subr.mxu0 0.0
    %204 = vmatpush1.msra.mxu0 0.0
    %205 = vmatprep.subr.mxu0 0.0
    %206 = vmatpush1.msra.mxu0 0.0
    %207 = vmatprep.subr.mxu0 0.0
    %208 = vmatpush1.msra.mxu0 0.0
    %209 = vmatprep.subr.mxu0 0.0
    %210 = vmatpush1.msra.mxu0 0.0
    %211 = vmatprep.subr.mxu0 0.0
    %212 = vmatpush1.msra.mxu0 0.0
    %213 = vmatprep.subr.mxu0 0.0
    %214 = vmatpush1.msra.mxu0 0.0
    %215 = vmatprep.subr.mxu0 0.0
    %216 = vmatpush1.msra.mxu0 0.0
    %217 = vmatprep.subr.mxu0 0.0
    %218 = vmatpush1.msra.mxu0 0.0
    %219 = vmatprep.subr.mxu0 0.0
    %220 = vmatpush1.msra.mxu0 0.0
    %221 = vmatprep.subr.mxu0 0.0
    %222 = vmatpush1.msra.mxu0 0.0
    %223 = vmatprep.subr.mxu0 0.0
    %224 = vmatpush1.msra.mxu0 0.0
    %225 = vmatprep.subr.mxu0 0.0
    %226 = vmatpush1.msra.mxu0 0.0
    %227 = vmatprep.subr.mxu0 0.0
    %228 = vmatpush1.msra.mxu0 0.0
    %229 = vmatprep.subr.mxu0 0.0
    %230 = vmatpush1.msra.mxu0 0.0
    %231 = vmatprep.subr.mxu0 0.0
    %232 = vmatpush1.msra.mxu0 0.0
    %233 = vmatprep.subr.mxu0 0.0
    %234 = vmatpush1.msra.mxu0 0.0
    %235 = vmatprep.subr.mxu0 0.0
    %236 = vmatpush1.msra.mxu0 0.0
    %237 = vmatprep.subr.mxu0 0.0
    %238 = vmatpush1.msra.mxu0 0.0
    %239 = vmatprep.subr.mxu0 0.0
    %240 = vmatpush1.msra.mxu0 0.0
    %241 = vmatprep.subr.mxu0 0.0
    %242 = vmatpush1.msra.mxu0 0.0
    %243 = vmatprep.subr.mxu0 0.0
    %244 = vmatpush1.msra.mxu0 0.0
    %245 = vmatprep.subr.mxu0 0.0
    %246 = vmatpush1.msra.mxu0 0.0
    %247 = vmatprep.subr.mxu0 0.0
    %248 = vmatpush1.msra.mxu0 0.0
    %249 = vmatprep.mubr.f32.mxu0 0.0
    %250 = vmatmul.mubr.f32.gmra.mrb[0].mxu0 %v173
    %v251 = vpop.f32.mrb[0].mxu0
    %v252 = vadd.f32 %v159, %v251
    %v253 = vpop.f32.mrb[0].mxu0
    %254 = vmatprep.mubr.f32.mxu0 0.0
    %255 = vmatmul.mubr.f32.gmra.mrb[0].mxu0 %v176
    %v256 = vpop.f32.mrb[0].mxu0
    %v257 = vadd.f32 %v164, %v256
    %v258 = vpop.f32.mrb[0].mxu0
    %259 = vmatprep.mubr.f32.mxu0 0.0
    %260 = vmatmul.mubr.f32.gmra.mrb[0].mxu0 %v179
    %v261 = vpop.f32.mrb[0].mxu0
    %v262 = vadd.f32 %v169, %v261
    %v263 = vpop.f32.mrb[0].mxu0
    %264 = vdwg.mxu0
    %v265 = vtanh.pop %v252
    %v266 = vtanh.pop %v257
    %v267 = vtanh.pop %v262
    %269 = vset.pattern.permute.xlu0 0
    %270 = vperm.xlu0 %269, %v42
    %v271 = vpop.permute.xlu0 %270
    %v273 = vlaneseq
    %v274 = vshrl.u32 %v273, 7
    %v275 = vsub.s32 0, %v274
    %v276 = vrot.slane %v271, %v275
    %v278 = vsel %vm171, %v41, 0
    %v281 = vsel %vm181, %v267, 0
    %283 = vmatprep.subr.mxu0 0.0
    %284 = vmatpush1.msra.mxu0 %v265
    %285 = vmatprep.subr.mxu0 0.0
    %286 = vmatpush1.msra.mxu0 %v266
    %287 = vmatprep.subr.mxu0 0.0
    %288 = vmatpush1.msra.mxu0 %v281
    %289 = vmatprep.subr.mxu0 0.0
    %290 = vmatpush1.msra.mxu0 0.0
    %291 = vmatprep.subr.mxu0 0.0
    %292 = vmatpush1.msra.mxu0 0.0
    %293 = vmatprep.subr.mxu0 0.0
    %294 = vmatpush1.msra.mxu0 0.0
    %295 = vmatprep.subr.mxu0 0.0
    %296 = vmatpush1.msra.mxu0 0.0
    %297 = vmatprep.subr.mxu0 0.0
    %298 = vmatpush1.msra.mxu0 0.0
    %299 = vmatprep.subr.mxu0 0.0
    %300 = vmatpush1.msra.mxu0 0.0
    %301 = vmatprep.subr.mxu0 0.0
    %302 = vmatpush1.msra.mxu0 0.0
    %303 = vmatprep.subr.mxu0 0.0
    %304 = vmatpush1.msra.mxu0 0.0
    %305 = vmatprep.subr.mxu0 0.0
    %306 = vmatpush1.msra.mxu0 0.0
    %307 = vmatprep.subr.mxu0 0.0
    %308 = vmatpush1.msra.mxu0 0.0
    %309 = vmatprep.subr.mxu0 0.0
    %310 = vmatpush1.msra.mxu0 0.0
    %311 = vmatprep.subr.mxu0 0.0
    %312 = vmatpush1.msra.mxu0 0.0
    %313 = vmatprep.subr.mxu0 0.0
    %314 = vmatpush1.msra.mxu0 0.0
    %315 = vmatprep.subr.mxu0 0.0
    %316 = vmatpush1.msra.mxu0 0.0
    %317 = vmatprep.subr.mxu0 0.0
    %318 = vmatpush1.msra.mxu0 0.0
    %319 = vmatprep.subr.mxu0 0.0
    %320 = vmatpush1.msra.mxu0 0.0
    %321 = vmatprep.subr.mxu0 0.0
    %322 = vmatpush1.msra.mxu0 0.0
    %323 = vmatprep.subr.mxu0 0.0
    %324 = vmatpush1.msra.mxu0 0.0
    %325 = vmatprep.subr.mxu0 0.0
    %326 = vmatpush1.msra.mxu0 0.0
    %327 = vmatprep.subr.mxu0 0.0
    %328 = vmatpush1.msra.mxu0 0.0
    %329 = vmatprep.subr.mxu0 0.0
    %330 = vmatpush1.msra.mxu0 0.0
    %331 = vmatprep.subr.mxu0 0.0
    %332 = vmatpush1.msra.mxu0 0.0
    %333 = vmatprep.subr.mxu0 0.0
    %334 = vmatpush1.msra.mxu0 0.0
    %335 = vmatprep.subr.mxu0 0.0
    %336 = vmatpush1.msra.mxu0 0.0
    %337 = vmatprep.subr.mxu0 0.0
    %338 = vmatpush1.msra.mxu0 0.0
    %339 = vmatprep.subr.mxu0 0.0
    %340 = vmatpush1.msra.mxu0 0.0
    %341 = vmatprep.subr.mxu0 0.0
    %342 = vmatpush1.msra.mxu0 0.0
    %343 = vmatprep.subr.mxu0 0.0
    %344 = vmatpush1.msra.mxu0 0.0
    %345 = vmatprep.subr.mxu0 0.0
    %346 = vmatpush1.msra.mxu0 0.0
    %347 = vmatprep.mubr.f32.mxu0 0.0
    %348 = vmatmul.mubr.f32.gmra.mrb[0].mxu0 %v278
    %v349 = vpop.f32.mrb[0].mxu0
    %v350 = vadd.f32 %v276, %v349
    %v351 = vpop.f32.mrb[0].mxu0
    %352 = vdwg.mxu0
    %353 = vst [vmem:[#allocation3] sm:$0x1] %v350
    // Predicated region
    $region30: #{tpu_custom_call.1} parent=1 // pred_check
      _
    $region31: #{tpu_custom_call.1} parent=1 // pred_check_branch
      %355 = sbr.rel (0) target = $region33
    $region32: #{tpu_custom_call.1} parent=1 // pred_region
      %s357 = ssub.s32 16, 16
      %358 = vsyncadd [#allocation4], %s357
      %s360 = sshll.u32 [#allocation3], 4
      %s361 = int_to_ptr.vmem [resolvable:$true] %s360
      %363 = dma.vmem_to_hbm [thread:$0]  %s361, 16, %s7, [#allocation4]
    $region33: #{tpu_custom_call.1} parent=1 // pred_fallthru
      _
    // Predicated region
    $region34: #{tpu_custom_call.1} parent=1 // pred_check
      _
    $region35: #{tpu_custom_call.1} parent=1 // pred_check_branch
      %365 = sbr.rel (0) target = $region37
    $region36: #{tpu_custom_call.1} parent=1 // pred_region
      %366 = dma.done [#allocation4], 16
    $region37: #{tpu_custom_call.1} parent=1 // pred_fallthru
      _
    %367 = vsyncpa [#allocation4], 1

</llo_original>
